<compile_context>
chip_gen: v5e
topology: v5e:2x2
jax: 0.10.0
libtpu: 0.0.40
codegen_flags: <defaults>
</compile_context>

<pallas_src>
import functools

import jax
import jax.numpy as jnp
from jax import lax
from jax.experimental import pallas as pl
from jax.experimental.pallas import tpu as pltpu


def _round_up(x, m):
    return ((x + m - 1) // m) * m


# NT contraction: contract dim 1 of both operands (a[1,K] . b[N,K]^T -> [1,N]).
_NT_DIMS = (((1,), (1,)), ((), ()))


def _mlp_kernel(x_ref, w1_ref, b1_ref, w2_ref, b2_ref, o_ref, *, activation):
    # fc1 on the MXU: [tile_b, F] @ [F, H] + b1[1, H], f32 accumulate.
    h = jnp.dot(x_ref[...], w1_ref[...], preferred_element_type=jnp.float32)
    h = h + b1_ref[...]
    if activation == "relu":
        h = jnp.maximum(h, 0.0)
    elif activation == "tanh":
        h = jnp.tanh(h)
    # fc2 fused as w2[1, H] . h[tile_b, H]^T -> lane-dense (1, tile_b) row:
    # unmasked full-width stores, no M/N=1 matmul column.  (If a bundle dump
    # ever shows an explicit vxpose of h on the critical path, swap this for a
    # VPU multiply + XLU lane-reduce; HBM-bound, so not expected to matter.)
    z = lax.dot_general(w2_ref[...], h, _NT_DIMS,
                        preferred_element_type=jnp.float32)
    z = z + b2_ref[0, 0]  # scalar bias from SMEM
    # sigmoid: exp and approximate reciprocal both issue on the idle EUP.
    o_ref[...] = pl.reciprocal(1.0 + jnp.exp(-z), approx=True)


def _single_layer_kernel(x_ref, w1_ref, b1_ref, o_ref):
    # hidden_size == 0: per-row dot product, w1[1, F] . x[tile_b, F]^T -> [1, tile_b].
    z = lax.dot_general(w1_ref[...], x_ref[...], _NT_DIMS,
                        preferred_element_type=jnp.float32)
    z = z + b1_ref[0, 0]  # scalar bias from SMEM
    o_ref[...] = pl.reciprocal(1.0 + jnp.exp(-z), approx=True)


def author_predict_nn_forward(x, params, hidden_size, activation,
                              *, target_block_bytes=2 << 20):
    """Pallas forward for AuthorPredictNN.

    x:       [B, 2*input_size] float32 (streamed unpadded)
    params:  'w1' [2*input_size, H or 1], 'b1' [1, H or 1],
             and (if hidden_size > 0) 'w2' [H, 1], 'b2' [1, 1].
    Returns: [B, 1] float32 probabilities.
    """
    B, F = x.shape
    if x.dtype != jnp.float32:
        x = x.astype(jnp.float32)
    H = hidden_size if hidden_size > 0 else 1
    itemsize = 4  # f32 stream

    # --- batch tile: ~2 MiB of X per block, multiple of 128, >=2 grid steps ---
    if B <= 256:
        tile_b = B                                   # single tile; block == full dims
    else:
        tile_target = max(512, target_block_bytes // (F * itemsize))
        tile_target = _round_up(min(tile_target, 32768), 128)
        # cap at ceil(B/2) rounded to 128 so both v7x TensorCores get a tile
        tile_b = min(tile_target, _round_up(-(-B // 2), 128))

    def vmem_estimate(tb):
        e = 2 * tb * F * itemsize      # X block, double-buffered
        e += F * H * itemsize          # w1 (resident, constant index map)
        e += tb * H * 4                # fc1 activation tile (f32)
        e += 2 * tb * 4                # lane-dense output row, double-buffered
        e += 4 * H * 4                 # b1 / w2
        return e

    if B > 256:
        # Shrink in 128-multiples so partial-tile BlockSpecs stay legal.
        while tile_b > 128 and vmem_estimate(tile_b) > 16 * 2**20:
            tile_b = max(128, ((tile_b // 2) // 128) * 128)

    num_tiles = pl.cdiv(B, tile_b)
    # ~2x the working set (small floor only for Mosaic internal scratch headroom).
    vmem_limit = int(min(64 * 2**20, max(4 * 2**20, 2 * vmem_estimate(tile_b))))

    compiler_params = pltpu.CompilerParams(
        dimension_semantics=("parallel",),   # shard batch tiles across TCs on v7x
        vmem_limit_bytes=vmem_limit,
    )
    out_shape = jax.ShapeDtypeStruct((1, B), jnp.float32)        # lane-dense row
    x_spec = pl.BlockSpec((tile_b, F), lambda i: (i, 0))         # unpadded X stream
    out_spec = pl.BlockSpec((1, tile_b), lambda i: (0, i))
    smem_spec = pl.BlockSpec(memory_space=pltpu.MemorySpace.SMEM)

    if hidden_size > 0:
        w1 = params["w1"].astype(jnp.float32)                    # [F, H], unpadded
        b1 = params["b1"].reshape(1, H).astype(jnp.float32)
        w2 = params["w2"].reshape(1, H).astype(jnp.float32)      # row vector
        b2 = params["b2"].reshape(1, 1).astype(jnp.float32)      # scalar -> SMEM
        kernel = functools.partial(_mlp_kernel, activation=activation)
        out_row = pl.pallas_call(
            kernel,
            out_shape=out_shape,
            grid=(num_tiles,),
            in_specs=[
                x_spec,
                pl.BlockSpec((F, H), lambda i: (0, 0)),          # weights stay resident
                pl.BlockSpec((1, H), lambda i: (0, 0)),
                pl.BlockSpec((1, H), lambda i: (0, 0)),
                smem_spec,
            ],
            out_specs=out_spec,
            compiler_params=compiler_params,
        )(x, w1, b1, w2, b2)
    else:
        w1 = params["w1"].reshape(1, F).astype(jnp.float32)
        b1 = params["b1"].reshape(1, 1).astype(jnp.float32)      # scalar -> SMEM
        out_row = pl.pallas_call(
            _single_layer_kernel,
            out_shape=out_shape,
            grid=(num_tiles,),
            in_specs=[
                x_spec,
                pl.BlockSpec((1, F), lambda i: (0, 0)),
                smem_spec,
            ],
            out_specs=out_spec,
            compiler_params=compiler_params,
        )(x, w1, b1)

    # Return the module's [B, 1] column layout (pure metadata reshape).
    return out_row.reshape(B, 1)


def init_params(key, input_size, hidden_size):
    """Deterministic init mimicking nn.Linear default (uniform +-1/sqrt(fan_in))."""
    in_features = input_size * 2
    k1, k2, k3, k4 = jax.random.split(key, 4)
    bound1 = 1.0 / jnp.sqrt(in_features)
    if hidden_size > 0:
        bound2 = 1.0 / jnp.sqrt(hidden_size)
        return {
            "w1": jax.random.uniform(k1, (in_features, hidden_size), jnp.float32,
                                     -bound1, bound1),
            "b1": jax.random.uniform(k2, (1, hidden_size), jnp.float32,
                                     -bound1, bound1),
            "w2": jax.random.uniform(k3, (hidden_size, 1), jnp.float32,
                                     -bound2, bound2),
            "b2": jax.random.uniform(k4, (1, 1), jnp.float32, -bound2, bound2),
        }
    return {
        "w1": jax.random.uniform(k1, (in_features, 1), jnp.float32, -bound1, bound1),
        "b1": jax.random.uniform(k2, (1, 1), jnp.float32, -bound1, bound1),
    }


def reference_forward(x, params, hidden_size, activation):
    """Plain-JAX reference of the PyTorch forward, for verification."""
    h = x @ params["w1"] + params["b1"]
    if hidden_size > 0:
        if activation == "relu":
            h = jnp.maximum(h, 0.0)
        elif activation == "tanh":
            h = jnp.tanh(h)
        h = h @ params["w2"] + params["b2"]
    return jax.nn.sigmoid(h)


if __name__ == "__main__":
    key = jax.random.PRNGKey(0)
    kx, kp, kx2, kp2 = jax.random.split(key, 4)

    # Case 1: two-layer model with ReLU at small shapes (single-tile path).
    batch, input_size, hidden_size, activation = 8, 16, 32, "relu"
    x = jax.random.normal(kx, (batch, input_size * 2), dtype=jnp.float32)
    params = init_params(kp, input_size, hidden_size)
    out = jax.block_until_ready(
        author_predict_nn_forward(x, params, hidden_size, activation))
    ref = reference_forward(x, params, hidden_size, activation)
    assert out.shape == (batch, 1)
    assert jnp.allclose(out, ref, atol=5e-3), "two-layer mismatch vs reference"

    # Case 2: multi-tile batch with a partial last block (exercises the cdiv
    # grid, dropped OOB stores and the tanh path).
    batch2, input2, hidden2 = 1030, 16, 64
    x2 = jax.random.normal(kx2, (batch2, input2 * 2), dtype=jnp.float32)
    params2 = init_params(kp2, input2, hidden2)
    out2 = jax.block_until_ready(
        author_predict_nn_forward(x2, params2, hidden2, "tanh"))
    ref2 = reference_forward(x2, params2, hidden2, "tanh")
    assert out2.shape == (batch2, 1)
    assert jnp.allclose(out2, ref2, atol=5e-3), "multi-tile mismatch vs reference"

    # Case 3: hidden_size == 0 path (single Linear -> sigmoid).
    params3 = init_params(kp, input_size, 0)
    out3 = jax.block_until_ready(
        author_predict_nn_forward(x, params3, 0, None))
    ref3 = reference_forward(x, params3, 0, None)
    assert out3.shape == (batch, 1)
    assert jnp.allclose(out3, ref3, atol=5e-3), "single-layer mismatch vs reference"

    print("KERNEL_OK")
</pallas_src>

<mosaic_0001>
module attributes {stable_mosaic.version = 11 : i64} {
  func.func @_mlp_kernel(%arg0: i32, %arg1: memref<8x32xf32, #tpu.memory_space<vmem>>, %arg2: memref<32x32xf32, #tpu.memory_space<vmem>>, %arg3: memref<1x32xf32, #tpu.memory_space<vmem>>, %arg4: memref<1x32xf32, #tpu.memory_space<vmem>>, %arg5: memref<1x1xf32, #tpu.memory_space<smem>>, %arg6: memref<1x8xf32, #tpu.memory_space<vmem>>) attributes {dimension_semantics = [#tpu.dimension_semantics<parallel>], iteration_bounds = array<i64: 1>, scalar_prefetch = 0 : i64, scratch_operands = 0 : i64, tpu.core_type = #tpu.core_type<tc>, window_params = [{transform_indices = @transform_0, window_bounds = array<i64: 8, 32>}, {pipeline_mode = #tpu.pipeline_mode<synchronous>, transform_indices = @transform_1, window_bounds = array<i64: 32, 32>}, {pipeline_mode = #tpu.pipeline_mode<synchronous>, transform_indices = @transform_2, window_bounds = array<i64: 1, 32>}, {pipeline_mode = #tpu.pipeline_mode<synchronous>, transform_indices = @transform_3, window_bounds = array<i64: 1, 32>}, {transform_indices = @transform_4, window_bounds = array<i64: 1, 1>}, {transform_indices = @transform_5, window_bounds = array<i64: 1, 8>}]} {
    %c0 = arith.constant 0 : index
    %c0_0 = arith.constant 0 : index
    %0 = vector.load %arg1[%c0, %c0_0] : memref<8x32xf32, #tpu.memory_space<vmem>>, vector<8x32xf32>
    %c0_1 = arith.constant 0 : index
    %c0_2 = arith.constant 0 : index
    %1 = vector.load %arg2[%c0_1, %c0_2] : memref<32x32xf32, #tpu.memory_space<vmem>>, vector<32x32xf32>
    %cst = arith.constant dense<0.000000e+00> : vector<8x32xf32>
    %2 = tpu.matmul %0, %1, %cst {dimension_numbers = #tpu.dot_dimension_numbers<[1], [0], [0], [1], [0, 0, 1, 1], [], []>} : vector<8x32xf32>, vector<32x32xf32>, vector<8x32xf32> -> vector<8x32xf32>
    %c0_3 = arith.constant 0 : index
    %c0_4 = arith.constant 0 : index
    %3 = vector.load %arg3[%c0_3, %c0_4] : memref<1x32xf32, #tpu.memory_space<vmem>>, vector<1x32xf32>
    %4 = vector.broadcast %3 : vector<1x32xf32> to vector<8x32xf32>
    %5 = arith.addf %2, %4 : vector<8x32xf32>
    %cst_5 = arith.constant 0.000000e+00 : f32
    %6 = vector.broadcast %cst_5 : f32 to vector<8x32xf32>
    %7 = arith.maximumf %5, %6 : vector<8x32xf32>
    %c0_6 = arith.constant 0 : index
    %c0_7 = arith.constant 0 : index
    %8 = vector.load %arg4[%c0_6, %c0_7] : memref<1x32xf32, #tpu.memory_space<vmem>>, vector<1x32xf32>
    %cst_8 = arith.constant dense<0.000000e+00> : vector<1x8xf32>
    %9 = tpu.matmul %8, %7, %cst_8 {dimension_numbers = #tpu.dot_dimension_numbers<[1], [1], [0], [0], [0, 0, 1, 0], [], []>} : vector<1x32xf32>, vector<8x32xf32>, vector<1x8xf32> -> vector<1x8xf32>
    %c0_9 = arith.constant 0 : index
    %c0_10 = arith.constant 0 : index
    %10 = memref.load %arg5[%c0_9, %c0_10] : memref<1x1xf32, #tpu.memory_space<smem>>
    %11 = vector.broadcast %10 : f32 to vector<1x8xf32>
    %12 = arith.addf %9, %11 : vector<1x8xf32>
    %cst_11 = arith.constant 0.000000e+00 : f32
    %13 = vector.broadcast %cst_11 : f32 to vector<1x8xf32>
    %14 = arith.subf %13, %12 : vector<1x8xf32>
    %15 = math.exp %14 : vector<1x8xf32>
    %cst_12 = arith.constant 1.000000e+00 : f32
    %16 = vector.broadcast %cst_12 : f32 to vector<1x8xf32>
    %17 = arith.addf %16, %15 : vector<1x8xf32>
    %18 = tpu.reciprocal %17 {approx = true} : vector<1x8xf32> -> vector<1x8xf32>
    %c0_13 = arith.constant 0 : index
    %c0_14 = arith.constant 0 : index
    %19 = vector.load %arg6[%c0_13, %c0_14] : memref<1x8xf32, #tpu.memory_space<vmem>>, vector<1x8xf32>
    tpu.vector_store %arg6[%c0_13, %c0_14], %18 {strides = array<i32>} : memref<1x8xf32, #tpu.memory_space<vmem>>, vector<1x8xf32>,
    return
  }
  func.func @transform_0(%arg0: i32) -> (i32, i32) {
    %c0_i32 = arith.constant 0 : i32
    %c0_i32_0 = arith.constant 0 : i32
    return %arg0, %c0_i32 : i32, i32
  }
  func.func @transform_1(%arg0: i32) -> (i32, i32) {
    %c0_i32 = arith.constant 0 : i32
    %c0_i32_0 = arith.constant 0 : i32
    %c0_i32_1 = arith.constant 0 : i32
    return %c0_i32, %c0_i32_0 : i32, i32
  }
  func.func @transform_2(%arg0: i32) -> (i32, i32) {
    %c0_i32 = arith.constant 0 : i32
    %c0_i32_0 = arith.constant 0 : i32
    %c0_i32_1 = arith.constant 0 : i32
    return %c0_i32, %c0_i32_0 : i32, i32
  }
  func.func @transform_3(%arg0: i32) -> (i32, i32) {
    %c0_i32 = arith.constant 0 : i32
    %c0_i32_0 = arith.constant 0 : i32
    %c0_i32_1 = arith.constant 0 : i32
    return %c0_i32, %c0_i32_0 : i32, i32
  }
  func.func @transform_4(%arg0: i32) -> (i32, i32) {
    %c0_i32 = arith.constant 0 : i32
    %c0_i32_0 = arith.constant 0 : i32
    %c0_i32_1 = arith.constant 0 : i32
    return %c0_i32, %c0_i32_0 : i32, i32
  }
  func.func @transform_5(%arg0: i32) -> (i32, i32) {
    %c0_i32 = arith.constant 0 : i32
    %c0_i32_0 = arith.constant 0 : i32
    return %c0_i32, %arg0 : i32, i32
  }
}

</mosaic_0001>

<llo_original>
// kernel: tpu_custom_call.1
$region0: #{tpu_custom_call.1}
  #allocation0 [shape = 'u32[]', space=smem, size = 0x4, offset = 0x4, fixed_abs, tag = 'smem constant byte address 0x4 - core index']
  #allocation1 [shape = 'u32[72,128]{1,0:T(1,128)}', space=vmem, size = 0x9000, scoped, tag = 'internal scratch']
  #allocation2 [shape = 'f32[1,1]{1,0:T(1,128)S(6)}', space=smem, size = 0x200, scoped, tag = 'scoped memory for tpu_custom_call.1']
  %s0 = inlined_call_operand.hbm [shape: f32[8,32], index: 0, kind: input, shape index: {}]
  %s1 = inlined_call_operand.hbm [shape: f32[32,32], index: 1, kind: input, shape index: {}]
  %s2 = inlined_call_operand.vmem [shape: f32[1,32], index: 2, kind: input, shape index: {}]
  %s3 = inlined_call_operand.vmem [shape: f32[1,32], index: 3, kind: input, shape index: {}]
  %s4 = inlined_call_operand.<no memory space> [shape: f32[1,1], index: 4, kind: input, shape index: {}]
  %s5 = inlined_call_operand.hbm [shape: f32[1,8], index: 5, kind: output, shape index: {}]
  %s6 = sld [smem:[#allocation0]]
  $region38: #{tpu_custom_call.1} parent=0
    _
  %s8 = ssub.s32 1, %s6
  %s9 = scalar_select 0, %s8, %s6
  %10 = sst [smem:[#allocation2]] %s4
  $region1: #{tpu_custom_call.1} parent=0
    #allocation3 [shape = 'u8[4096]{0}', space=vmem, size = 0x1000, scoped, tag = 'input window, operand 0, single buffered']
    #allocation4 [shape = 's32[1]{0}', space=sflag, size = 0x4, scoped, tag = 'scoped memory for tpu_custom_call.1']
    #allocation5 [shape = 's32[1]{0}', space=sflag, size = 0x4, scoped, tag = 'scoped memory for tpu_custom_call.1']
    #allocation6 [shape = 'u8[16384]{0}', space=vmem, size = 0x4000, scoped, tag = 'input window, operand 1, single buffered']
    #allocation7 [shape = 's32[1]{0}', space=sflag, size = 0x4, scoped, tag = 'scoped memory for tpu_custom_call.1']
    #allocation8 [shape = 'u8[512]{0}', space=vmem, size = 0x400, scoped, tag = 'output window, operand 0, single buffered']
    %11 = vsyncpa [#allocation4], 0
    %12 = vsyncpa [#allocation7], 0
    %13 = vsyncpa [#allocation5], 0
    // Predicated region
    $region2: #{tpu_custom_call.1} parent=1 // pred_check
      _
    $region3: #{tpu_custom_call.1} parent=1 // pred_check_branch
      %15 = sbr.rel (0) target = $region5
    $region4: #{tpu_custom_call.1} parent=1 // pred_region
      %17 = vsyncadd [#allocation4], 0
      %s19 = sshll.u32 %s0, 4
      %s20 = int_to_ptr.hbm [resolvable:$true] %s19
      %s21 = sshll.u32 [#allocation3], 4
      %s22 = int_to_ptr.vmem [resolvable:$true] %s21
      %24 = dma.hbm_to_vmem [thread:$0]  %s20, 128, %s22, [#allocation4]
    $region5: #{tpu_custom_call.1} parent=1 // pred_fallthru
      _
    // Predicated region
    $region6: #{tpu_custom_call.1} parent=1 // pred_check
      _
    $region7: #{tpu_custom_call.1} parent=1 // pred_check_branch
      %26 = sbr.rel (0) target = $region9
    $region8: #{tpu_custom_call.1} parent=1 // pred_region
      %28 = vsyncadd [#allocation7], 0
      %s29 = sshll.u32 %s1, 4
      %s30 = int_to_ptr.hbm [resolvable:$true] %s29
      %s31 = sshll.u32 [#allocation6], 4
      %s32 = int_to_ptr.vmem [resolvable:$true] %s31
      %37 = dma.hbm_to_vmem [thread:$0]  %s30, 512, %s32, [#allocation7], 128, 128, 8
    $region9: #{tpu_custom_call.1} parent=1 // pred_fallthru
      _
    // Predicated region
    $region10: #{tpu_custom_call.1} parent=1 // pred_check
      _
    $region11: #{tpu_custom_call.1} parent=1 // pred_check_branch
      %39 = sbr.rel (0) target = $region13
    $region12: #{tpu_custom_call.1} parent=1 // pred_region
      _
    $region13: #{tpu_custom_call.1} parent=1 // pred_fallthru
      _
    // Predicated region
    $region14: #{tpu_custom_call.1} parent=1 // pred_check
      _
    $region15: #{tpu_custom_call.1} parent=1 // pred_check_branch
      %41 = sbr.rel (0) target = $region17
    $region16: #{tpu_custom_call.1} parent=1 // pred_region
      _
    $region17: #{tpu_custom_call.1} parent=1 // pred_fallthru
      _
    // Predicated region
    $region18: #{tpu_custom_call.1} parent=1 // pred_check
      _
    $region19: #{tpu_custom_call.1} parent=1 // pred_check_branch
      %43 = sbr.rel (0) target = $region21
    $region20: #{tpu_custom_call.1} parent=1 // pred_region
      _
    $region21: #{tpu_custom_call.1} parent=1 // pred_fallthru
      _
    // Predicated region
    $region22: #{tpu_custom_call.1} parent=1 // pred_check
      _
    $region23: #{tpu_custom_call.1} parent=1 // pred_check_branch
      %45 = sbr.rel (0) target = $region25
    $region24: #{tpu_custom_call.1} parent=1 // pred_region
      %47 = dma.done [#allocation4], 128
    $region25: #{tpu_custom_call.1} parent=1 // pred_fallthru
      _
    // Predicated region
    $region26: #{tpu_custom_call.1} parent=1 // pred_check
      _
    $region27: #{tpu_custom_call.1} parent=1 // pred_check_branch
      %49 = sbr.rel (0) target = $region29
    $region28: #{tpu_custom_call.1} parent=1 // pred_region
      %51 = dma.done [#allocation7], 512
    $region29: #{tpu_custom_call.1} parent=1 // pred_fallthru
      _
    %v52 = vld [vmem:[#allocation3] sm:$0xff]
    %v53 = vld [vmem:[#allocation6] sm:$0xff]
    %v54 = vld [vmem:[#allocation6 + $0x8] sm:$0xff]
    %v55 = vld [vmem:[#allocation6 + $0x10] sm:$0xff]
    %v56 = vld [vmem:[#allocation6 + $0x18] sm:$0xff]
    %v57 = vld [vmem:[%s2] sm:$0x1]
    %v59 = vperm.slane %v57, 0
    %vm61 = vcmask 261120
    %v63 = vsel %vm61, %v52, 0
    %65 = vmatpush.msra.mxu0 0.0
    %66 = vmatpush.msra.mxu0 0.0
    %67 = vmatpush.msra.mxu0 0.0
    %68 = vmatpush.msra.mxu0 0.0
    %69 = vmatpush.msra.mxu0 0.0
    %70 = vmatpush.msra.mxu0 0.0
    %71 = vmatpush.msra.mxu0 0.0
    %72 = vmatpush.msra.mxu0 0.0
    %73 = vmatpush.msra.mxu0 0.0
    %74 = vmatpush.msra.mxu0 0.0
    %75 = vmatpush.msra.mxu0 0.0
    %76 = vmatpush.msra.mxu0 0.0
    %77 = vmatpush.msra.mxu0 %v56
    %78 = vmatpush.msra.mxu0 %v55
    %79 = vmatpush.msra.mxu0 %v54
    %80 = vmatpush.msra.mxu0 %v53
    %81 = vmatmul.f32.gmra.mxu0 %v63
    %v82 = vpop.f32.mrf.mxu0
    %v83 = vadd.f32 %v59, %v82
    %84 = vdwg.mxu0
    %v85 = vmax.f32 %v83, 0.0
    %v86 = vld [vmem:[%s3] sm:$0x1]
    %s87 = sld [smem:[#allocation2]]
    %v88 = vstv %s87
    %v90 = vsel %vm61, %v86, 0
    %v93 = vsel %vm61, %v85, 0
    %95 = vmatpush.xpose.msra.mxu0 0.0
    %96 = vmatpush.xpose.msra.mxu0 0.0
    %97 = vmatpush.xpose.msra.mxu0 0.0
    %98 = vmatpush.xpose.msra.mxu0 0.0
    %99 = vmatpush.xpose.msra.mxu0 0.0
    %100 = vmatpush.xpose.msra.mxu0 0.0
    %101 = vmatpush.xpose.msra.mxu0 0.0
    %102 = vmatpush.xpose.msra.mxu0 0.0
    %103 = vmatpush.xpose.msra.mxu0 0.0
    %104 = vmatpush.xpose.msra.mxu0 0.0
    %105 = vmatpush.xpose.msra.mxu0 0.0
    %106 = vmatpush.xpose.msra.mxu0 0.0
    %107 = vmatpush.xpose.msra.mxu0 0.0
    %108 = vmatpush.xpose.msra.mxu0 0.0
    %109 = vmatpush.xpose.msra.mxu0 0.0
    %110 = vmatpush.xpose.msra.mxu0 %v93
    %111 = vmatmul.f32.gmra.mxu0 %v90
    %v112 = vpop.f32.mrf.mxu0
    %v113 = vadd.f32 %v88, %v112
    %114 = vdwg.mxu0
    %v115 = vsub.f32 0.0, %v113
    %v116 = vmul.f32 %v115, 1.442695
    %v117 = vpow.pop %v116
    %v118 = vadd.f32 %v117, 1.0
    %v119 = vrcp.pop %v118
    %vm120 = vcmask 57344
    %121 = vst.msk [vmem:[#allocation8] sm:$0x1] %vm120, %v119
    // Predicated region
    $region30: #{tpu_custom_call.1} parent=1 // pred_check
      _
    $region31: #{tpu_custom_call.1} parent=1 // pred_check_branch
      %123 = sbr.rel (0) target = $region33
    $region32: #{tpu_custom_call.1} parent=1 // pred_region
      %125 = vsyncadd [#allocation5], 0
      %s127 = sshll.u32 [#allocation8], 4
      %s128 = int_to_ptr.vmem [resolvable:$true] %s127
      %s129 = sshll.u32 %s5, 4
      %s130 = int_to_ptr.hbm [resolvable:$true] %s129
      %132 = dma.vmem_to_hbm [thread:$0]  %s128, 16, %s130, [#allocation5]
    $region33: #{tpu_custom_call.1} parent=1 // pred_fallthru
      _
    // Predicated region
    $region34: #{tpu_custom_call.1} parent=1 // pred_check
      _
    $region35: #{tpu_custom_call.1} parent=1 // pred_check_branch
      %134 = sbr.rel (0) target = $region37
    $region36: #{tpu_custom_call.1} parent=1 // pred_region
      %136 = dma.done [#allocation5], 16
    $region37: #{tpu_custom_call.1} parent=1 // pred_fallthru
      _
    %137 = vsyncpa [#allocation4], 1
    %138 = vsyncpa [#allocation7], 1
    %139 = vsyncpa [#allocation5], 1

</llo_original>
